<compile_context>
chip_gen: v5e
topology: v5e:2x2
jax: 0.10.0
libtpu: 0.0.40
codegen_flags: <defaults>
</compile_context>

<pallas_src>
import functools

import jax
import jax.numpy as jnp
from jax.experimental import pallas as pl
from jax.experimental.pallas import tpu as pltpu

LANE = 128
CHUNK = 8 * LANE  # main-region granularity; keeps row count a multiple of 8


def _default_num_slices() -> int:
    """2 row-range slices on multi-TensorCore chips (v7x), else 1."""
    try:
        kind = str(jax.devices()[0].device_kind).lower()
    except Exception:
        return 1
    return 2 if ("v7" in kind or "tpu7" in kind or "7x" in kind) else 1


def _dice_kernel(x_ref, t_ref, o_ref, *, block_rows, blocks_per_slice,
                 total_rows, need_mask):
    i = pl.program_id(1)  # sequential reduction axis within a slice

    @pl.when(i == 0)
    def _():
        o_ref[...] = jnp.zeros_like(o_ref)

    xl = x_ref[...].astype(jnp.float32)
    # sigmoid(x) == 0.5*(tanh(0.5*x)+1): one EUP push instead of exp + recip.
    p = 0.5 * (jnp.tanh(0.5 * xl) + 1.0)
    t = t_ref[...].astype(jnp.float32)

    def fold(v):
        # (block_rows, 128) -> (8, 128): vreg-wise VPU adds only; the cross-lane
        # reduction is deferred to the (tiny) XLA epilogue.
        return jnp.sum(v.reshape(-1, 8, LANE), axis=0)

    def accumulate(pp, tt):
        o_ref[0, 0, :, :] += fold(pp * tt)  # intersection partial
        o_ref[0, 1, :, :] += fold(pp)       # sum(sigmoid(inputs)) partial
        o_ref[0, 2, :, :] += fold(tt)       # sum(targets) partial

    if not need_mask:
        accumulate(p, t)
    else:
        s = pl.program_id(0)
        # Logical (unclamped) first row of this block; duplicate (clamped)
        # blocks have row0 >= total_rows and are zeroed entirely.
        row0 = (s * blocks_per_slice + i) * block_rows
        is_boundary = row0 + block_rows > total_rows

        @pl.when(jnp.logical_not(is_boundary))
        def _():
            accumulate(p, t)  # interior fast path: no mask cost

        @pl.when(is_boundary)
        def _():
            local_row = jax.lax.broadcasted_iota(
                jnp.int32, (block_rows, LANE), 0)
            valid = (row0 + local_row) < total_rows
            accumulate(jnp.where(valid, p, 0.0), jnp.where(valid, t, 0.0))


def dice_loss(inputs, targets, *, compress=True, max_block_rows=None,
              num_slices=None):
    """Pallas implementation of DiceLoss.forward(inputs, targets).

    compress=True streams bf16 logits + int8 targets through the kernel
    (assumes binary {0,1} targets, standard for Dice); use compress=False for
    an exact f32 path with arbitrary-valued targets.
    """
    smooth = 1e-05
    x_flat = inputs.reshape(-1)
    t_flat = targets.reshape(-1)
    n = x_flat.shape[0]

    # Main region: largest multiple of 8*128 elements (no pad copy); the
    # sub-chunk tail is accumulated exactly in the XLA epilogue below.
    n_main = (n // CHUNK) * CHUNK
    rows = n_main // LANE

    if num_slices is None:
        num_slices = _default_num_slices()

    if rows > 0:
        if compress:
            # 3 B/elem instead of 8; casts fuse with upstream producers under
            # jit. In-kernel accumulation stays f32.
            x2 = x_flat[:n_main].astype(jnp.bfloat16).reshape(rows, LANE)
            t2 = t_flat[:n_main].astype(jnp.int8).reshape(rows, LANE)
        else:
            x2 = x_flat[:n_main].astype(jnp.float32).reshape(rows, LANE)
            t2 = t_flat[:n_main].astype(jnp.float32).reshape(rows, LANE)

        if max_block_rows is None:
            in_bytes = x2.dtype.itemsize + t2.dtype.itemsize
            # ~3 MiB (compressed) / ~4 MiB (f32) of input per pipeline buffer.
            max_block_rows = 8192 if in_bytes <= 4 else 4096
        max_block_rows = max(32, (max_block_rows // 32) * 32)  # int8 (32,128)

        block_rows = min(max_block_rows, rows)
        total_blocks = pl.cdiv(rows, block_rows)
        num_slices = max(1, min(num_slices, total_blocks))
        bps = pl.cdiv(total_blocks, num_slices)  # blocks per slice
        need_mask = (rows % block_rows != 0) or (bps * num_slices != total_blocks)
        last_block = total_blocks - 1

        if bps * num_slices == total_blocks:
            def in_map(s, i):
                return (s * bps + i, 0)
        else:
            def in_map(s, i):
                # Clamp so overrun blocks never DMA out of range; their
                # contribution is zeroed by the in-kernel mask.
                return (jnp.minimum(s * bps + i, last_block), 0)

        kernel = functools.partial(
            _dice_kernel,
            block_rows=block_rows,
            blocks_per_slice=bps,
            total_rows=rows,
            need_mask=need_mask,
        )

        partials = pl.pallas_call(
            kernel,
            out_shape=jax.ShapeDtypeStruct((num_slices, 3, 8, LANE), jnp.float32),
            grid_spec=pltpu.PrefetchScalarGridSpec(
                num_scalar_prefetch=0,
                grid=(num_slices, bps),
                in_specs=[
                    pl.BlockSpec((block_rows, LANE), in_map),
                    pl.BlockSpec((block_rows, LANE), in_map),
                ],
                out_specs=pl.BlockSpec((1, 3, 8, LANE), lambda s, i: (s, 0, 0, 0)),
            ),
            compiler_params=pltpu.CompilerParams(
                # TODO(synk): on v7x, confirm the leading "parallel" axis shards
                # across the 2 TensorCores; switch to pltpu.CORE_PARALLEL if not.
                dimension_semantics=("parallel", "arbitrary"),
                vmem_limit_bytes=32 * 1024 * 1024,
            ),
        )(x2, t2)

        sums = jnp.sum(partials, axis=(0, 2, 3))  # -> (3,)
    else:
        sums = jnp.zeros((3,), jnp.float32)

    if n_main < n:
        # Exact f32 tail (< 1024 elements) folded in outside the kernel; this
        # replaces the old full-array jnp.pad copy.
        xt = jax.nn.sigmoid(x_flat[n_main:].astype(jnp.float32))
        tt = t_flat[n_main:].astype(jnp.float32)
        sums = sums + jnp.stack([jnp.sum(xt * tt), jnp.sum(xt), jnp.sum(tt)])

    inter, s_in, s_tg = sums[0], sums[1], sums[2]
    return 1.0 - (2.0 * inter + smooth) / (s_in + s_tg + smooth)


def _dice_ref(inputs, targets):
    smooth = 1e-05
    x = jax.nn.sigmoid(inputs.astype(jnp.float32)).reshape(-1)
    t = targets.astype(jnp.float32).reshape(-1)
    inter = jnp.sum(x * t)
    return 1.0 - (2.0 * inter + smooth) / (jnp.sum(x) + jnp.sum(t) + smooth)


if __name__ == "__main__":
    key = jax.random.PRNGKey(0)
    k1, k2, k3, k4, k5, k6 = jax.random.split(key, 6)

    # Primary: NCHW logits + binary targets, size divisible by 8*128.
    inputs = jax.random.normal(k1, (2, 4, 16, 16), dtype=jnp.float32)
    targets = (jax.random.uniform(k2, (2, 4, 16, 16)) > 0.5).astype(jnp.float32)
    out = jax.block_until_ready(dice_loss(inputs, targets))
    ref = jax.block_until_ready(_dice_ref(inputs, targets))
    assert jnp.allclose(out, ref, atol=2e-3, rtol=2e-3), (out, ref)

    # Exact (uncompressed) path must match the f32 reference tightly.
    out_exact = jax.block_until_ready(dice_loss(inputs, targets, compress=False))
    assert jnp.allclose(out_exact, ref, atol=1e-5, rtol=1e-5), (out_exact, ref)

    # Non-divisible size: exercises tail-in-epilogue + gated boundary mask +
    # fully-masked duplicate block (force small blocks and 2 slices).
    inputs2 = jax.random.normal(k3, (2, 3, 40, 40), dtype=jnp.float32)
    targets2 = (jax.random.uniform(k4, (2, 3, 40, 40)) > 0.5).astype(jnp.float32)
    out2 = jax.block_until_ready(
        dice_loss(inputs2, targets2, max_block_rows=32, num_slices=2))
    ref2 = jax.block_until_ready(_dice_ref(inputs2, targets2))
    assert jnp.allclose(out2, ref2, atol=2e-3, rtol=2e-3), (out2, ref2)

    # Tiny input (< one 1024-element chunk): pure-epilogue fallback path.
    inputs3 = jax.random.normal(k5, (3, 3, 7, 11), dtype=jnp.float32)
    targets3 = (jax.random.uniform(k6, (3, 3, 7, 11)) > 0.5).astype(jnp.float32)
    out3 = jax.block_until_ready(dice_loss(inputs3, targets3))
    ref3 = jax.block_until_ready(_dice_ref(inputs3, targets3))
    assert jnp.allclose(out3, ref3, atol=1e-5, rtol=1e-5), (out3, ref3)

    print("KERNEL_OK")
</pallas_src>

<mosaic_0001>
module attributes {stable_mosaic.version = 11 : i64} {
  func.func @_dice_kernel(%arg0: i32, %arg1: i32, %arg2: memref<16x128xbf16, #tpu.memory_space<vmem>>, %arg3: memref<16x128xi8, #tpu.memory_space<vmem>>, %arg4: memref<1x3x8x128xf32, #tpu.memory_space<vmem>>) attributes {dimension_semantics = [#tpu.dimension_semantics<parallel>, #tpu.dimension_semantics<arbitrary>], iteration_bounds = array<i64: 1, 1>, scalar_prefetch = 0 : i64, scratch_operands = 0 : i64, tpu.core_type = #tpu.core_type<tc>, window_params = [{transform_indices = @transform_0, window_bounds = array<i64: 16, 128>}, {transform_indices = @transform_1, window_bounds = array<i64: 16, 128>}, {transform_indices = @transform_2, window_bounds = array<i64: 1, 3, 8, 128>}]} {
    %c0_i32 = arith.constant 0 : i32
    %0 = arith.cmpi eq, %arg1, %c0_i32 : i32
    %1 = arith.extui %0 : i1 to i32
    %c0_i32_0 = arith.constant 0 : i32
    %2 = arith.cmpi ne, %1, %c0_i32_0 : i32
    scf.if %2 {
      %cst_31 = arith.constant 0.000000e+00 : f32
      %39 = vector.broadcast %cst_31 : f32 to vector<1x3x8x128xf32>
      %c0_32 = arith.constant 0 : index
      %c0_33 = arith.constant 0 : index
      %c0_34 = arith.constant 0 : index
      %c0_35 = arith.constant 0 : index
      %40 = vector.load %arg4[%c0_32, %c0_33, %c0_34, %c0_35] : memref<1x3x8x128xf32, #tpu.memory_space<vmem>>, vector<1x3x8x128xf32>
      tpu.vector_store %arg4[%c0_32, %c0_33, %c0_34, %c0_35], %39 {strides = array<i32>} : memref<1x3x8x128xf32, #tpu.memory_space<vmem>>, vector<1x3x8x128xf32>,
    } else {
    }
    %c0 = arith.constant 0 : index
    %c0_1 = arith.constant 0 : index
    %3 = vector.load %arg2[%c0, %c0_1] : memref<16x128xbf16, #tpu.memory_space<vmem>>, vector<16x128xbf16>
    %4 = arith.extf %3 : vector<16x128xbf16> to vector<16x128xf32>
    %cst = arith.constant 5.000000e-01 : f32
    %5 = vector.broadcast %cst : f32 to vector<16x128xf32>
    %6 = arith.mulf %5, %4 : vector<16x128xf32>
    %7 = math.tanh %6 : vector<16x128xf32>
    %cst_2 = arith.constant 1.000000e+00 : f32
    %8 = vector.broadcast %cst_2 : f32 to vector<16x128xf32>
    %9 = arith.addf %7, %8 : vector<16x128xf32>
    %cst_3 = arith.constant 5.000000e-01 : f32
    %10 = vector.broadcast %cst_3 : f32 to vector<16x128xf32>
    %11 = arith.mulf %10, %9 : vector<16x128xf32>
    %c0_4 = arith.constant 0 : index
    %c0_5 = arith.constant 0 : index
    %12 = vector.load %arg3[%c0_4, %c0_5] : memref<16x128xi8, #tpu.memory_space<vmem>>, vector<16x128xi8>
    %13 = arith.sitofp %12 : vector<16x128xi8> to vector<16x128xf32>
    %c0_6 = arith.constant 0 : index
    %c0_7 = arith.constant 0 : index
    %c0_8 = arith.constant 0 : index
    %c0_9 = arith.constant 0 : index
    %14 = vector.load %arg4[%c0_6, %c0_7, %c0_8, %c0_9] : memref<1x3x8x128xf32, #tpu.memory_space<vmem>>, vector<1x1x8x128xf32>
    %15 = vector.shape_cast %14 : vector<1x1x8x128xf32> to vector<8x128xf32>
    %16 = arith.mulf %11, %13 : vector<16x128xf32>
    %17 = vector.shape_cast %16 : vector<16x128xf32> to vector<2x8x128xf32>
    %cst_10 = arith.constant dense<0.000000e+00> : vector<8x128xf32>
    %18 = vector.multi_reduction <add>, %17, %cst_10 [0] : vector<2x8x128xf32> to vector<8x128xf32>
    %19 = arith.addf %15, %18 : vector<8x128xf32>
    %c0_11 = arith.constant 0 : index
    %c0_12 = arith.constant 0 : index
    %c0_13 = arith.constant 0 : index
    %c0_14 = arith.constant 0 : index
    %20 = vector.load %arg4[%c0_11, %c0_12, %c0_13, %c0_14] : memref<1x3x8x128xf32, #tpu.memory_space<vmem>>, vector<1x1x8x128xf32>
    %21 = vector.shape_cast %20 : vector<1x1x8x128xf32> to vector<8x128xf32>
    %22 = vector.shape_cast %19 : vector<8x128xf32> to vector<1x1x8x128xf32>
    tpu.vector_store %arg4[%c0_11, %c0_12, %c0_13, %c0_14], %22 {strides = array<i32>} : memref<1x3x8x128xf32, #tpu.memory_space<vmem>>, vector<1x1x8x128xf32>,
    %c0_15 = arith.constant 0 : index
    %c1 = arith.constant 1 : index
    %c0_16 = arith.constant 0 : index
    %c0_17 = arith.constant 0 : index
    %23 = vector.load %arg4[%c0_15, %c1, %c0_16, %c0_17] : memref<1x3x8x128xf32, #tpu.memory_space<vmem>>, vector<1x1x8x128xf32>
    %24 = vector.shape_cast %23 : vector<1x1x8x128xf32> to vector<8x128xf32>
    %25 = vector.shape_cast %11 : vector<16x128xf32> to vector<2x8x128xf32>
    %cst_18 = arith.constant dense<0.000000e+00> : vector<8x128xf32>
    %26 = vector.multi_reduction <add>, %25, %cst_18 [0] : vector<2x8x128xf32> to vector<8x128xf32>
    %27 = arith.addf %24, %26 : vector<8x128xf32>
    %c0_19 = arith.constant 0 : index
    %c1_20 = arith.constant 1 : index
    %c0_21 = arith.constant 0 : index
    %c0_22 = arith.constant 0 : index
    %28 = vector.load %arg4[%c0_19, %c1_20, %c0_21, %c0_22] : memref<1x3x8x128xf32, #tpu.memory_space<vmem>>, vector<1x1x8x128xf32>
    %29 = vector.shape_cast %28 : vector<1x1x8x128xf32> to vector<8x128xf32>
    %30 = vector.shape_cast %27 : vector<8x128xf32> to vector<1x1x8x128xf32>
    tpu.vector_store %arg4[%c0_19, %c1_20, %c0_21, %c0_22], %30 {strides = array<i32>} : memref<1x3x8x128xf32, #tpu.memory_space<vmem>>, vector<1x1x8x128xf32>,
    %c0_23 = arith.constant 0 : index
    %c2 = arith.constant 2 : index
    %c0_24 = arith.constant 0 : index
    %c0_25 = arith.constant 0 : index
    %31 = vector.load %arg4[%c0_23, %c2, %c0_24, %c0_25] : memref<1x3x8x128xf32, #tpu.memory_space<vmem>>, vector<1x1x8x128xf32>
    %32 = vector.shape_cast %31 : vector<1x1x8x128xf32> to vector<8x128xf32>
    %33 = vector.shape_cast %13 : vector<16x128xf32> to vector<2x8x128xf32>
    %cst_26 = arith.constant dense<0.000000e+00> : vector<8x128xf32>
    %34 = vector.multi_reduction <add>, %33, %cst_26 [0] : vector<2x8x128xf32> to vector<8x128xf32>
    %35 = arith.addf %32, %34 : vector<8x128xf32>
    %c0_27 = arith.constant 0 : index
    %c2_28 = arith.constant 2 : index
    %c0_29 = arith.constant 0 : index
    %c0_30 = arith.constant 0 : index
    %36 = vector.load %arg4[%c0_27, %c2_28, %c0_29, %c0_30] : memref<1x3x8x128xf32, #tpu.memory_space<vmem>>, vector<1x1x8x128xf32>
    %37 = vector.shape_cast %36 : vector<1x1x8x128xf32> to vector<8x128xf32>
    %38 = vector.shape_cast %35 : vector<8x128xf32> to vector<1x1x8x128xf32>
    tpu.vector_store %arg4[%c0_27, %c2_28, %c0_29, %c0_30], %38 {strides = array<i32>} : memref<1x3x8x128xf32, #tpu.memory_space<vmem>>, vector<1x1x8x128xf32>,
    return
  }
  func.func @transform_0(%arg0: i32, %arg1: i32) -> (i32, i32) {
    %c1_i32 = arith.constant 1 : i32
    %0 = arith.muli %arg0, %c1_i32 : i32
    %1 = arith.addi %0, %arg1 : i32
    %c0_i32 = arith.constant 0 : i32
    %c0_i32_0 = arith.constant 0 : i32
    return %1, %c0_i32 : i32, i32
  }
  func.func @transform_1(%arg0: i32, %arg1: i32) -> (i32, i32) {
    %c1_i32 = arith.constant 1 : i32
    %0 = arith.muli %arg0, %c1_i32 : i32
    %1 = arith.addi %0, %arg1 : i32
    %c0_i32 = arith.constant 0 : i32
    %c0_i32_0 = arith.constant 0 : i32
    return %1, %c0_i32 : i32, i32
  }
  func.func @transform_2(%arg0: i32, %arg1: i32) -> (i32, i32, i32, i32) {
    %c0_i32 = arith.constant 0 : i32
    %c0_i32_0 = arith.constant 0 : i32
    %c0_i32_1 = arith.constant 0 : i32
    %c0_i32_2 = arith.constant 0 : i32
    return %arg0, %c0_i32, %c0_i32_0, %c0_i32_1 : i32, i32, i32, i32
  }
}

</mosaic_0001>

<llo_original>
// kernel: tpu_custom_call.1
$region0: #{tpu_custom_call.1}
  #allocation0 [shape = 'u32[]', space=smem, size = 0x4, offset = 0x4, fixed_abs, tag = 'smem constant byte address 0x4 - core index']
  #allocation1 [shape = 'u32[72,128]{1,0:T(1,128)}', space=vmem, size = 0x9000, scoped, tag = 'internal scratch']
  %s0 = inlined_call_operand.hbm [shape: bf16[16,128], index: 0, kind: input, shape index: {}]
  %s1 = inlined_call_operand.hbm [shape: s8[16,128], index: 1, kind: input, shape index: {}]
  %s2 = inlined_call_operand.hbm [shape: f32[1,3,8,128], index: 2, kind: output, shape index: {}]
  %s3 = sld [smem:[#allocation0]]
  $region30: #{tpu_custom_call.1} parent=0
    _
  %s5 = ssub.s32 1, %s3
  %s6 = scalar_select 0, %s5, %s3
  $region1: #{tpu_custom_call.1} parent=0
    #allocation2 [shape = 'u8[4096]{0}', space=vmem, size = 0x1000, scoped, tag = 'input window, operand 0, single buffered']
    #allocation3 [shape = 's32[1]{0}', space=sflag, size = 0x4, scoped, tag = 'scoped memory for tpu_custom_call.1']
    #allocation4 [shape = 's32[1]{0}', space=sflag, size = 0x4, scoped, tag = 'scoped memory for tpu_custom_call.1']
    #allocation5 [shape = 'u8[2048]{0}', space=vmem, size = 0x800, scoped, tag = 'input window, operand 1, single buffered']
    #allocation6 [shape = 's32[1]{0}', space=sflag, size = 0x4, scoped, tag = 'scoped memory for tpu_custom_call.1']
    #allocation7 [shape = 'u8[12288]{0}', space=vmem, size = 0x3000, scoped, tag = 'output window, operand 0, single buffered']
    %7 = vsyncpa [#allocation3], 0
    %8 = vsyncpa [#allocation6], 0
    %9 = vsyncpa [#allocation4], 0
    // Predicated region
    $region2: #{tpu_custom_call.1} parent=1 // pred_check
      _
    $region3: #{tpu_custom_call.1} parent=1 // pred_check_branch
      %11 = sbr.rel (0) target = $region5
    $region4: #{tpu_custom_call.1} parent=1 // pred_region
      %s12 = sadd.s32 0, 0
      %s13 = smul.u32 2, %s12
      %15 = vsyncadd [#allocation3], 0
      %s16 = smul.addr %s13, 4
      %s17 = scalar_lea.hbm %s0, %s16
      %s18 = sshll.u32 %s17, 4
      %s19 = int_to_ptr.hbm [resolvable:$true] %s18
      %s20 = sshll.u32 [#allocation2], 4
      %s21 = int_to_ptr.vmem [resolvable:$true] %s20
      %26 = dma.hbm_to_vmem [thread:$0]  %s19, 128, %s21, [#allocation3], 64, 64, 4
    $region5: #{tpu_custom_call.1} parent=1 // pred_fallthru
      _
    // Predicated region
    $region6: #{tpu_custom_call.1} parent=1 // pred_check
      _
    $region7: #{tpu_custom_call.1} parent=1 // pred_check_branch
      %28 = sbr.rel (0) target = $region9
    $region8: #{tpu_custom_call.1} parent=1 // pred_region
      %s29 = sadd.s32 0, 0
      %s30 = smul.u32 2, %s29
      %32 = vsyncadd [#allocation6], 0
      %s33 = smul.addr %s30, 2
      %s34 = scalar_lea.hbm %s1, %s33
      %s35 = sshll.u32 %s34, 4
      %s36 = int_to_ptr.hbm [resolvable:$true] %s35
      %s37 = sshll.u32 [#allocation5], 4
      %s38 = int_to_ptr.vmem [resolvable:$true] %s37
      %43 = dma.hbm_to_vmem [thread:$0]  %s36, 64, %s38, [#allocation6], 32, 32, 2
    $region9: #{tpu_custom_call.1} parent=1 // pred_fallthru
      _
    // Predicated region
    $region10: #{tpu_custom_call.1} parent=1 // pred_check
      _
    $region11: #{tpu_custom_call.1} parent=1 // pred_check_branch
      %45 = sbr.rel (0) target = $region13
    $region12: #{tpu_custom_call.1} parent=1 // pred_region
      %47 = dma.done [#allocation3], 128
    $region13: #{tpu_custom_call.1} parent=1 // pred_fallthru
      _
    // Predicated region
    $region14: #{tpu_custom_call.1} parent=1 // pred_check
      _
    $region15: #{tpu_custom_call.1} parent=1 // pred_check_branch
      %49 = sbr.rel (0) target = $region17
    $region16: #{tpu_custom_call.1} parent=1 // pred_region
      %51 = dma.done [#allocation6], 64
    $region17: #{tpu_custom_call.1} parent=1 // pred_fallthru
      _
    %s52 = sadd.s32 0, 0
    %s53 = smul.u32 2, %s52
    %s54 = sadd.s32 0, 0
    %s55 = smul.u32 2, %s54
    %p56 = scmp.eq.s32.totalorder 0, 0
    // Predicated region
    $region18: #{tpu_custom_call.1} parent=1 // pred_check
      %p57 = pneg %p56
    $region19: #{tpu_custom_call.1} parent=1 // pred_check_branch
      %59 = sbr.rel (%p57) target = $region21
    $region20: #{tpu_custom_call.1} parent=1 // pred_region
      %60 = vst [vmem:[#allocation7] sm:$0xff] 0.0
      %61 = vst [vmem:[#allocation7 + $0x8] sm:$0xff] 0.0
      %62 = vst [vmem:[#allocation7 + $0x10] sm:$0xff] 0.0
    $region21: #{tpu_custom_call.1} parent=1 // pred_fallthru
      _
    %v63 = vld [vmem:[#allocation2] sm:$0xf]
    %v64 = vld [vmem:[#allocation2 + $0x4] sm:$0xf]
    %v65 = vunpack.c.l.bf16 %v63
    %v66 = vunpack.c.l.bf16 %v64
    %v67 = vmul.f32 %v65, 0.5
    %v68 = vmul.f32 %v66, 0.5
    %v69 = vtanh.pop %v67
    %v70 = vtanh.pop %v68
    %v71 = vadd.f32 %v69, 1.0
    %v72 = vadd.f32 %v70, 1.0
    %v73 = vmul.f32 %v71, 0.5
    %v74 = vmul.f32 %v72, 0.5
    %v75 = vld [vmem:[#allocation5] sm:$0x3]
    %v76 = vld [vmem:[#allocation5 + $0x2] sm:$0x3]
    %v77 = vunpack.c.0.s8 %v75
    %v78 = vunpack.c.0.s8 %v76
    %v79 = vcvt.s32.f32 %v77
    %v80 = vcvt.s32.f32 %v78
    %v81 = vld [vmem:[#allocation7] sm:$0xff]
    %v82 = vmul.f32 %v73, %v79
    %v83 = vmul.f32 %v74, %v80
    %v84 = vadd.f32 %v82, %v83
    %v85 = vadd.f32 %v81, %v84
    %86 = vst [vmem:[#allocation7] sm:$0xff] %v85
    %s87 = scalar_lea.vmem [#allocation7], 8
    %v88 = vld [vmem:[%s87] sm:$0xff]
    %v89 = vadd.f32 %v73, %v74
    %v90 = vadd.f32 %v88, %v89
    %91 = vst [vmem:[%s87] sm:$0xff] %v90
    %s92 = scalar_lea.vmem [#allocation7], 16
    %v93 = vld [vmem:[%s92] sm:$0xff]
    %v94 = vadd.f32 %v79, %v80
    %v95 = vadd.f32 %v93, %v94
    %96 = vst [vmem:[%s92] sm:$0xff] %v95
    // Predicated region
    $region22: #{tpu_custom_call.1} parent=1 // pred_check
      _
    $region23: #{tpu_custom_call.1} parent=1 // pred_check_branch
      %98 = sbr.rel (0) target = $region25
    $region24: #{tpu_custom_call.1} parent=1 // pred_region
      %100 = vsyncadd [#allocation4], 0
      %s101 = sshll.u32 [#allocation7], 4
      %s102 = int_to_ptr.vmem [resolvable:$true] %s101
      %s103 = sshll.u32 %s2, 4
      %s104 = int_to_ptr.hbm [resolvable:$true] %s103
      %109 = dma.vmem_to_hbm [thread:$0]  %s102, 384, %s104, [#allocation4], 128, 128, 8
    $region25: #{tpu_custom_call.1} parent=1 // pred_fallthru
      _
    // Predicated region
    $region26: #{tpu_custom_call.1} parent=1 // pred_check
      _
    $region27: #{tpu_custom_call.1} parent=1 // pred_check_branch
      %111 = sbr.rel (0) target = $region29
    $region28: #{tpu_custom_call.1} parent=1 // pred_region
      %113 = dma.done [#allocation4], 384
    $region29: #{tpu_custom_call.1} parent=1 // pred_fallthru
      _
    %114 = vsyncpa [#allocation3], 1
    %115 = vsyncpa [#allocation6], 1
    %116 = vsyncpa [#allocation4], 1

</llo_original>
